<compile_context>
chip_gen: v7x
topology: tpu7x:2x2x1
jax: 0.10.0
libtpu: 0.0.40
codegen_flags: <defaults>
</compile_context>

<pallas_src>
import math

import jax
import jax.numpy as jnp
from jax.experimental import pallas as pl
from jax.experimental.pallas import tpu as pltpu

FRAME = 256
HOP = 256
FFT = 512
NBINS = FFT // 2 + 1          # 257
TM_MAX = 1024                 # ~4.6 MiB VMEM w/ double buffering -> safe on v5e/v6e/v7x


def _stft_matmul_kernel(frames_ref, basis_ref, out_ref):
    # frames_ref: (TM, FRAME) f32, basis_ref: (FRAME, NBINS) f32
    out_ref[...] = jnp.dot(
        frames_ref[...], basis_ref[...], preferred_element_type=jnp.float32
    )


def _build_basis():
    # periodic hann window, as torch.hann_window(256) (periodic=True default)
    n = jnp.arange(FRAME, dtype=jnp.float32)
    window = 0.5 * (1.0 - jnp.cos(2.0 * math.pi * n / FRAME))
    k = jnp.arange(NBINS, dtype=jnp.float32)
    # real part of DFT basis, frame zero-padded to FFT=512
    cos_mat = jnp.cos(2.0 * math.pi * n[:, None] * k[None, :] / FFT)  # (256, 257)
    norm = 1.0 / math.sqrt(FRAME)  # old torch.stft: normalized=True -> frame_length^-0.5
    return (window[:, None] * cos_mat * norm).astype(jnp.float32)    # (256, 257)


def _choose_tm(R):
    # Big tiles amortize per-grid-step overhead (kernel is HBM-bound); cap at
    # TM_MAX for VMEM headroom on all generations; keep >=2 grid steps so both
    # v7x TensorCores are used; row tile must be a multiple of 8 (sublanes).
    half = -(-R // 2)                       # cdiv(R, 2)
    tm = ((half + 7) // 8) * 8              # round up to multiple of 8
    return max(8, min(TM_MAX, tm))


def _stft_matmul(frames, basis):
    R = frames.shape[0]
    tm = _choose_tm(R)
    grid = (pl.cdiv(R, tm),)                # no host-side row pad; Pallas masks tail
    flops = 2 * R * FRAME * NBINS
    bytes_accessed = 4 * (R * FRAME + FRAME * NBINS + R * NBINS)
    return pl.pallas_call(
        _stft_matmul_kernel,
        out_shape=jax.ShapeDtypeStruct((R, NBINS), jnp.float32),
        grid_spec=pltpu.PrefetchScalarGridSpec(
            num_scalar_prefetch=0,
            grid=grid,
            in_specs=[
                pl.BlockSpec((tm, FRAME), lambda i: (i, 0)),
                pl.BlockSpec((FRAME, NBINS), lambda i: (0, 0)),   # resident basis
            ],
            # last dim (257) equals full array extent -> allowed, no 384 pad
            out_specs=pl.BlockSpec((tm, NBINS), lambda i: (i, 0)),
        ),
        compiler_params=pltpu.CompilerParams(
            dimension_semantics=("parallel",),
        ),
        cost_estimate=pl.CostEstimate(
            flops=flops, transcendentals=0, bytes_accessed=bytes_accessed),
    )(frames, basis)


def stft_analyzer(x):
    """x: (..., T) float32 -> (prod(batch dims), num_frames, 257) float32."""
    T = x.shape[-1]
    x2 = x.reshape(-1, T)                       # x.view(-1, x.shape[-1])
    B = x2.shape[0]
    num_frames = (T - FRAME) // HOP + 1
    frames = x2[:, : num_frames * HOP].reshape(B * num_frames, FRAME)
    basis = _build_basis()
    out = _stft_matmul(frames.astype(jnp.float32), basis)
    return out.reshape(B, num_frames, NBINS)


if __name__ == "__main__":
    key = jax.random.PRNGKey(0)
    # small input: batch dims (2, 3), signal length 1024 -> 4 frames of 256
    x = jax.random.normal(key, (2, 3, 1024), dtype=jnp.float32)
    out = stft_analyzer(x)
    jax.block_until_ready(out)
    assert out.shape == (6, 4, NBINS), out.shape
    assert out.dtype == jnp.float32

    # reference check (plain jnp, same folded basis)
    frames_ref = x.reshape(-1, 1024)[:, :1024].reshape(-1, FRAME).astype(jnp.float32)
    ref = (frames_ref @ _build_basis()).reshape(6, 4, NBINS)
    assert jnp.allclose(out, ref, rtol=1e-3, atol=1e-3), float(jnp.max(jnp.abs(out - ref)))
    print("KERNEL_OK")
</pallas_src>

<mosaic_0001>
module attributes {stable_mosaic.version = 11 : i64} {
  func.func @_stft_matmul_kernel(%arg0: i32, %arg1: memref<16x256xf32, #tpu.memory_space<vmem>>, %arg2: memref<256x257xf32, #tpu.memory_space<vmem>>, %arg3: memref<16x257xf32, #tpu.memory_space<vmem>>) attributes {dimension_semantics = [#tpu.dimension_semantics<parallel>], iteration_bounds = array<i64: 2>, scalar_prefetch = 0 : i64, scratch_operands = 0 : i64, tpu.core_type = #tpu.core_type<tc>, window_params = [{transform_indices = @transform_0, window_bounds = array<i64: 16, 256>}, {pipeline_mode = #tpu.pipeline_mode<synchronous>, transform_indices = @transform_1, window_bounds = array<i64: 256, 257>}, {transform_indices = @transform_2, window_bounds = array<i64: 16, 257>}]} {
    %c0 = arith.constant 0 : index
    %c0_0 = arith.constant 0 : index
    %0 = vector.load %arg1[%c0, %c0_0] : memref<16x256xf32, #tpu.memory_space<vmem>>, vector<16x256xf32>
    %c0_1 = arith.constant 0 : index
    %c0_2 = arith.constant 0 : index
    %1 = vector.load %arg2[%c0_1, %c0_2] : memref<256x257xf32, #tpu.memory_space<vmem>>, vector<256x257xf32>
    %cst = arith.constant dense<0.000000e+00> : vector<16x257xf32>
    %2 = tpu.matmul %0, %1, %cst {dimension_numbers = #tpu.dot_dimension_numbers<[1], [0], [0], [1], [0, 0, 1, 1], [], []>} : vector<16x256xf32>, vector<256x257xf32>, vector<16x257xf32> -> vector<16x257xf32>
    %c0_3 = arith.constant 0 : index
    %c0_4 = arith.constant 0 : index
    %3 = vector.load %arg3[%c0_3, %c0_4] : memref<16x257xf32, #tpu.memory_space<vmem>>, vector<16x257xf32>
    tpu.vector_store %arg3[%c0_3, %c0_4], %2 {strides = array<i32>} : memref<16x257xf32, #tpu.memory_space<vmem>>, vector<16x257xf32>,
    return
  }
  func.func @transform_0(%arg0: i32) -> (i32, i32) {
    %c0_i32 = arith.constant 0 : i32
    %c0_i32_0 = arith.constant 0 : i32
    return %arg0, %c0_i32 : i32, i32
  }
  func.func @transform_1(%arg0: i32) -> (i32, i32) {
    %c0_i32 = arith.constant 0 : i32
    %c0_i32_0 = arith.constant 0 : i32
    %c0_i32_1 = arith.constant 0 : i32
    return %c0_i32, %c0_i32_0 : i32, i32
  }
  func.func @transform_2(%arg0: i32) -> (i32, i32) {
    %c0_i32 = arith.constant 0 : i32
    %c0_i32_0 = arith.constant 0 : i32
    return %arg0, %c0_i32 : i32, i32
  }
}

</mosaic_0001>

<llo_original>
// kernel: tpu_custom_call.1
$region0: #{tpu_custom_call.1}
  #allocation0 [shape = 'u32[]', space=smem, size = 0x4, offset = 0x4, fixed_abs, tag = 'smem constant byte address 0x4 - core index']
  #allocation1 [shape = 'u32[144,128]{1,0:T(1,128)}', space=vmem, size = 0x12000, scoped, tag = 'internal scratch']
  %s0 = inlined_call_operand.vmem [shape: f32[24,256], index: 0, kind: input, shape index: {}]
  %s1 = inlined_call_operand.vmem [shape: f32[256,257], index: 1, kind: input, shape index: {}]
  %s2 = inlined_call_operand.hbm [shape: f32[24,257], index: 2, kind: output, shape index: {}]
  %s3 = sld [smem:[#allocation0]]
  $region41: #{tpu_custom_call.1} parent=0
    _
  %s5 = ssub.s32 1, %s3
  %s6 = scalar_select 0, %s5, %s3
  $region1: #{tpu_custom_call.1} parent=0
    #allocation2 [shape = 'u8[49152]{0}', space=vmem, size = 0xc000, scoped, tag = 'output window, operand 0']
    #allocation3 [shape = 's32[2]{0}', space=sflag, size = 0x8, scoped, tag = 'scoped memory for tpu_custom_call.1']
    %7 = vsyncpa [#allocation3], 0
    %s8 = scalar_lea.sflag [#allocation3], 1
    %9 = vsyncpa %s8, 0
    loop: start=0, step=1, limit=4
    $region2: #{tpu_custom_call.1} parent=1 // loop_pre_header
      _
    $region3: #{tpu_custom_call.1} parent=1 // loop_header
      %s11 = sphi 0, %s15
      %p12 = scmp.ge.s32.totalorder %s11, 4
      %s21 = sphi 0, %s23
      %s24 = sphi 0, %s21
      %s25 = sphi 0, %s24
      %s41 = sphi 0, %s25
      %s45 = sphi 0, %s45
      %s47 = sphi 0, %s45
      %s48 = sphi 0, %s47
      %s62 = sphi 0, %s48
      %s68 = sphi 0, %s70
      %s71 = sphi 0, %s68
      %s72 = sphi 0, %s71
      %s88 = sphi 0, %s72
    $region4: #{tpu_custom_call.1} parent=1 // loop_header_branch
      %14 = sbr.rel (%p12) target = $region8
    $region5: #{tpu_custom_call.1} parent=1 // loop_body
      %s16 = ssub.s32 %s11, 1
      %s17 = ssub.s32 %s11, 2
      %s18 = sadd.s32 %s11, 1
      %s19 = ssub.s32 %s11, %s18
      %p20 = scmp.eq.s32.totalorder %s19, 0
      %s22 = sadd.s32 %s21, 1
      %s23 = scalar_select %p20, %s21, %s22
      %p26 = pneg %p20
      %p27 = scmp.eq.s32.totalorder %s11, 1
      %p28 = por %p26, %p27
      %p29 = scmp.ne.s32.totalorder %s21, %s24
      %p30 = scmp.eq.s32.totalorder %s11, 0
      %p31 = por %p29, %p30
      %p32 = scmp.ne.s32.totalorder %s21, %s24
      %p33 = scmp.eq.s32.totalorder %s16, 1
      %p34 = por %p32, %p33
      %p35 = scmp.ne.s32.totalorder %s24, %s25
      %p36 = scmp.eq.s32.totalorder %s16, 0
      %p37 = por %p35, %p36
      %p38 = scmp.ne.s32.totalorder %s24, %s25
      %p39 = scmp.eq.s32.totalorder %s17, 1
      %p40 = por %p38, %p39
      %p42 = scmp.ne.s32.totalorder %s25, %s41
      %p43 = scmp.eq.s32.totalorder %s17, 0
      %p44 = por %p42, %p43
      %s46 = sadd.s32 %s45, 1
      %p49 = scmp.eq.s32.totalorder %s11, 1
      %p50 = scmp.ne.s32.totalorder %s45, %s47
      %p51 = scmp.eq.s32.totalorder %s11, 0
      %p52 = por %p50, %p51
      %p53 = scmp.ne.s32.totalorder %s45, %s47
      %p54 = scmp.eq.s32.totalorder %s16, 1
      %p55 = por %p53, %p54
      %p56 = scmp.ne.s32.totalorder %s47, %s48
      %p57 = scmp.eq.s32.totalorder %s16, 0
      %p58 = por %p56, %p57
      %p59 = scmp.ne.s32.totalorder %s47, %s48
      %p60 = scmp.eq.s32.totalorder %s17, 1
      %p61 = por %p59, %p60
      %p63 = scmp.ne.s32.totalorder %s48, %s62
      %p64 = scmp.eq.s32.totalorder %s17, 0
      %p65 = por %p63, %p64
      %s66 = ssub.s32 %s11, %s18
      %p67 = scmp.eq.s32.totalorder %s66, 0
      %s69 = sadd.s32 %s68, 1
      %s70 = scalar_select %p67, %s68, %s69
      %p73 = pneg %p67
      %p74 = scmp.eq.s32.totalorder %s11, 1
      %p75 = por %p73, %p74
      %p76 = scmp.ne.s32.totalorder %s68, %s71
      %p77 = scmp.eq.s32.totalorder %s11, 0
      %p78 = por %p76, %p77
      %p79 = scmp.ne.s32.totalorder %s68, %s71
      %p80 = scmp.eq.s32.totalorder %s16, 1
      %p81 = por %p79, %p80
      %p82 = scmp.ne.s32.totalorder %s71, %s72
      %p83 = scmp.eq.s32.totalorder %s16, 0
      %p84 = por %p82, %p83
      %p85 = scmp.ne.s32.totalorder %s71, %s72
      %p86 = scmp.eq.s32.totalorder %s17, 1
      %p87 = por %p85, %p86
      %p89 = scmp.ne.s32.totalorder %s72, %s88
      %p90 = scmp.eq.s32.totalorder %s17, 0
      %p91 = por %p89, %p90
      %p92 = scmp.le.s32.totalorder 1, %s11
      %p93 = scmp.lt.s32.totalorder %s11, 3
      %p94 = pnand %p92, %p93
      %p95 = pneg %p94
      // Predicated region
      $region9: #{tpu_custom_call.1} parent=5 // pred_check
        _
      $region10: #{tpu_custom_call.1} parent=5 // pred_check_branch
        %97 = sbr.rel (%p94) target = $region12
      $region11: #{tpu_custom_call.1} parent=5 // pred_region
        %s98 = ssub.s32 %s11, 1
        // Predicated region
        $region13: #{tpu_custom_call.1} parent=11 // pred_check
          %p99 = pneg %p58
        $region14: #{tpu_custom_call.1} parent=11 // pred_check_branch
          %101 = sbr.rel (%p99) target = $region16
        $region15: #{tpu_custom_call.1} parent=11 // pred_region
          _
        $region16: #{tpu_custom_call.1} parent=11 // pred_fallthru
          _
      $region12: #{tpu_custom_call.1} parent=5 // pred_fallthru
        _
      %p102 = scmp.lt.s32.totalorder %s11, 2
      // Predicated region
      $region17: #{tpu_custom_call.1} parent=5 // pred_check
        %p103 = pneg %p102
      $region18: #{tpu_custom_call.1} parent=5 // pred_check_branch
        %105 = sbr.rel (%p103) target = $region20
      $region19: #{tpu_custom_call.1} parent=5 // pred_region
        // Predicated region
        $region21: #{tpu_custom_call.1} parent=19 // pred_check
          %p106 = pneg %p31
        $region22: #{tpu_custom_call.1} parent=19 // pred_check_branch
          %108 = sbr.rel (%p106) target = $region24
        $region23: #{tpu_custom_call.1} parent=19 // pred_region
          %s109 = smul.u32 2, %s11
          %s110 = ssub.s32 3, %s109
          %p111 = scmp.lt.s32.totalorder %s110, 2
          %s112 = scalar_select %p111, %s110, 2
          %s113 = smul.u32 128, %s112
          %s114 = smul.u32 %s113, 2
          %p115 = scmp.lt.s32.totalorder %s109, 2
          %s116 = scalar_select %p115, %s109, 2
          %s117 = smul.addr %s116, 2
          %s118 = smul.addr %s117, 8
          %s119 = scalar_lea.vmem %s0, %s118
          %s120 = smul.u32 2, %s11
          %s121 = ssub.s32 3, %s120
          %p122 = scmp.lt.s32.totalorder %s121, 2
          %s123 = scalar_select %p122, %s121, 2
          %s124 = smul.u32 128, %s123
          %s125 = smul.u32 %s124, 2
        $region24: #{tpu_custom_call.1} parent=19 // pred_fallthru
          _
      $region20: #{tpu_custom_call.1} parent=5 // pred_fallthru
        _
      %p126 = scmp.le.s32.totalorder 1, %s11
      %p127 = scmp.lt.s32.totalorder %s11, 3
      %p128 = pnand %p126, %p127
      %p129 = pneg %p128
      // Predicated region
      $region25: #{tpu_custom_call.1} parent=5 // pred_check
        _
      $region26: #{tpu_custom_call.1} parent=5 // pred_check_branch
        %131 = sbr.rel (%p128) target = $region28
      $region27: #{tpu_custom_call.1} parent=5 // pred_region
        %s132 = ssub.s32 %s11, 1
        %s133 = smul.u32 2, %s16
        %s134 = ssub.s32 3, %s133
        %p135 = scmp.lt.s32.totalorder %s134, 2
        %s136 = scalar_select %p135, %s134, 2
        %s137 = smul.u32 128, %s136
        %s138 = smul.u32 %s137, 2
        %p139 = scmp.lt.s32.totalorder %s133, 2
        %s140 = scalar_select %p139, %s133, 2
        %s141 = smul.addr %s140, 2
        %s142 = smul.addr %s141, 8
        %s143 = scalar_lea.vmem %s0, %s142
        %p144 = pneg %p37
        %p145 = pneg %p34
        %p146 = pneg %p58
        %p147 = pneg %p55
        %p148 = pneg %p84
        %p149 = pneg %p81
        %s150 = sand.u32 %s71, 1
        %s151 = scalar_lea.sflag [#allocation3], %s150
        %s152 = sand.u32 %s71, 1
        %s153 = smul.addr %s152, 48
        %s154 = scalar_lea.vmem [#allocation2], %s153
        %s155 = smul.u32 2, %s16
        %s156 = ssub.s32 3, %s155
        %p157 = scmp.lt.s32.totalorder %s156, 2
        %s158 = scalar_select %p157, %s156, 2
        %s159 = smul.u32 128, %s158
        %s160 = smul.u32 %s159, 2
        %p161 = scmp.lt.s32.totalorder %s155, 2
        %s162 = scalar_select %p161, %s155, 2
        %s163 = smul.addr %s162, 2
        %s164 = smul.addr %s163, 8
        %s165 = scalar_lea.vmem %s0, %s164
        %s166 = smul.u32 2, %s16
        %s167 = ssub.s32 3, %s166
        %p168 = scmp.lt.s32.totalorder %s167, 2
        %s169 = scalar_select %p168, %s167, 2
        %s170 = smul.u32 128, %s169
        %s171 = smul.u32 %s170, 2
        %s172 = smul.u32 2, %s16
        %s173 = ssub.s32 3, %s172
        %p174 = scmp.lt.s32.totalorder %s173, 2
        %s175 = scalar_select %p174, %s173, 2
        %s176 = smul.u32 128, %s175
        %s177 = smul.u32 %s176, 3
        %v178 = vld [vmem:[%s165] sm:$0xff]
        %v179 = vld [vmem:[%s165 + $0x8] sm:$0xff]
        %v180 = vld [vmem:[%s165 + $0x10] sm:$0xff]
        %v181 = vld [vmem:[%s165 + $0x18] sm:$0xff]
        %v182 = vld [vmem:[%s1] sm:$0xff]
        %v183 = vld [vmem:[%s1 + $0x8] sm:$0xff]
        %v184 = vld [vmem:[%s1 + $0x10] sm:$0xff]
        %v185 = vld [vmem:[%s1 + $0x18] sm:$0xff]
        %v186 = vld [vmem:[%s1 + $0x20] sm:$0xff]
        %v187 = vld [vmem:[%s1 + $0x28] sm:$0xff]
        %v188 = vld [vmem:[%s1 + $0x30] sm:$0xff]
        %v189 = vld [vmem:[%s1 + $0x38] sm:$0xff]
        %v190 = vld [vmem:[%s1 + $0x40] sm:$0xff]
        %v191 = vld [vmem:[%s1 + $0x48] sm:$0xff]
        %v192 = vld [vmem:[%s1 + $0x50] sm:$0xff]
        %v193 = vld [vmem:[%s1 + $0x58] sm:$0xff]
        %v194 = vld [vmem:[%s1 + $0x60] sm:$0xff]
        %v195 = vld [vmem:[%s1 + $0x68] sm:$0xff]
        %v196 = vld [vmem:[%s1 + $0x70] sm:$0xff]
        %v197 = vld [vmem:[%s1 + $0x78] sm:$0xff]
        %v198 = vld [vmem:[%s1 + $0x80] sm:$0xff]
        %v199 = vld [vmem:[%s1 + $0x88] sm:$0xff]
        %v200 = vld [vmem:[%s1 + $0x90] sm:$0xff]
        %v201 = vld [vmem:[%s1 + $0x98] sm:$0xff]
        %v202 = vld [vmem:[%s1 + $0xa0] sm:$0xff]
        %v203 = vld [vmem:[%s1 + $0xa8] sm:$0xff]
        %v204 = vld [vmem:[%s1 + $0xb0] sm:$0xff]
        %v205 = vld [vmem:[%s1 + $0xb8] sm:$0xff]
        %v206 = vld [vmem:[%s1 + $0xc0] sm:$0xff]
        %v207 = vld [vmem:[%s1 + $0xc8] sm:$0xff]
        %v208 = vld [vmem:[%s1 + $0xd0] sm:$0xff]
        %v209 = vld [vmem:[%s1 + $0xd8] sm:$0xff]
        %v210 = vld [vmem:[%s1 + $0xe0] sm:$0xff]
        %v211 = vld [vmem:[%s1 + $0xe8] sm:$0xff]
        %v212 = vld [vmem:[%s1 + $0xf0] sm:$0xff]
        %v213 = vld [vmem:[%s1 + $0xf8] sm:$0xff]
        %v214 = vld [vmem:[%s1 + $0x100] sm:$0xff]
        %v215 = vld [vmem:[%s1 + $0x108] sm:$0xff]
        %v216 = vld [vmem:[%s1 + $0x110] sm:$0xff]
        %v217 = vld [vmem:[%s1 + $0x118] sm:$0xff]
        %v218 = vld [vmem:[%s1 + $0x120] sm:$0xff]
        %v219 = vld [vmem:[%s1 + $0x128] sm:$0xff]
        %v220 = vld [vmem:[%s1 + $0x130] sm:$0xff]
        %v221 = vld [vmem:[%s1 + $0x138] sm:$0xff]
        %v222 = vld [vmem:[%s1 + $0x140] sm:$0xff]
        %v223 = vld [vmem:[%s1 + $0x148] sm:$0xff]
        %v224 = vld [vmem:[%s1 + $0x150] sm:$0xff]
        %v225 = vld [vmem:[%s1 + $0x158] sm:$0xff]
        %v226 = vld [vmem:[%s1 + $0x160] sm:$0xff]
        %v227 = vld [vmem:[%s1 + $0x168] sm:$0xff]
        %v228 = vld [vmem:[%s1 + $0x170] sm:$0xff]
        %v229 = vld [vmem:[%s1 + $0x178] sm:$0xff]
        %v230 = vld [vmem:[%s1 + $0x180] sm:$0xff]
        %v231 = vld [vmem:[%s1 + $0x188] sm:$0xff]
        %v232 = vld [vmem:[%s1 + $0x190] sm:$0xff]
        %v233 = vld [vmem:[%s1 + $0x198] sm:$0xff]
        %v234 = vld [vmem:[%s1 + $0x1a0] sm:$0xff]
        %v235 = vld [vmem:[%s1 + $0x1a8] sm:$0xff]
        %v236 = vld [vmem:[%s1 + $0x1b0] sm:$0xff]
        %v237 = vld [vmem:[%s1 + $0x1b8] sm:$0xff]
        %v238 = vld [vmem:[%s1 + $0x1c0] sm:$0xff]
        %v239 = vld [vmem:[%s1 + $0x1c8] sm:$0xff]
        %v240 = vld [vmem:[%s1 + $0x1d0] sm:$0xff]
        %v241 = vld [vmem:[%s1 + $0x1d8] sm:$0xff]
        %v242 = vld [vmem:[%s1 + $0x1e0] sm:$0xff]
        %v243 = vld [vmem:[%s1 + $0x1e8] sm:$0xff]
        %v244 = vld [vmem:[%s1 + $0x1f0] sm:$0xff]
        %v245 = vld [vmem:[%s1 + $0x1f8] sm:$0xff]
        %v246 = vld [vmem:[%s1 + $0x200] sm:$0xff]
        %v247 = vld [vmem:[%s1 + $0x208] sm:$0xff]
        %v248 = vld [vmem:[%s1 + $0x210] sm:$0xff]
        %v249 = vld [vmem:[%s1 + $0x218] sm:$0xff]
        %v250 = vld [vmem:[%s1 + $0x220] sm:$0xff]
        %v251 = vld [vmem:[%s1 + $0x228] sm:$0xff]
        %v252 = vld [vmem:[%s1 + $0x230] sm:$0xff]
        %v253 = vld [vmem:[%s1 + $0x238] sm:$0xff]
        %v254 = vld [vmem:[%s1 + $0x240] sm:$0xff]
        %v255 = vld [vmem:[%s1 + $0x248] sm:$0xff]
        %v256 = vld [vmem:[%s1 + $0x250] sm:$0xff]
        %v257 = vld [vmem:[%s1 + $0x258] sm:$0xff]
        %v258 = vld [vmem:[%s1 + $0x260] sm:$0xff]
        %v259 = vld [vmem:[%s1 + $0x268] sm:$0xff]
        %v260 = vld [vmem:[%s1 + $0x270] sm:$0xff]
        %v261 = vld [vmem:[%s1 + $0x278] sm:$0xff]
        %v262 = vld [vmem:[%s1 + $0x280] sm:$0xff]
        %v263 = vld [vmem:[%s1 + $0x288] sm:$0xff]
        %v264 = vld [vmem:[%s1 + $0x290] sm:$0xff]
        %v265 = vld [vmem:[%s1 + $0x298] sm:$0xff]
        %v266 = vld [vmem:[%s1 + $0x2a0] sm:$0xff]
        %v267 = vld [vmem:[%s1 + $0x2a8] sm:$0xff]
        %v268 = vld [vmem:[%s1 + $0x2b0] sm:$0xff]
        %v269 = vld [vmem:[%s1 + $0x2b8] sm:$0xff]
        %v270 = vld [vmem:[%s1 + $0x2c0] sm:$0xff]
        %v271 = vld [vmem:[%s1 + $0x2c8] sm:$0xff]
        %v272 = vld [vmem:[%s1 + $0x2d0] sm:$0xff]
        %v273 = vld [vmem:[%s1 + $0x2d8] sm:$0xff]
        %v274 = vld [vmem:[%s1 + $0x2e0] sm:$0xff]
        %v275 = vld [vmem:[%s1 + $0x2e8] sm:$0xff]
        %v276 = vld [vmem:[%s1 + $0x2f0] sm:$0xff]
        %v277 = vld [vmem:[%s1 + $0x2f8] sm:$0xff]
        %278 = vmatprep.subr.mxu0 %v183
        %279 = vmatpush1.msra.mxu0 %v182
        %280 = vmatprep.subr.mxu0 %v186
        %281 = vmatpush1.msra.mxu0 %v185
        %282 = vmatprep.subr.mxu0 %v189
        %283 = vmatpush1.msra.mxu0 %v188
        %284 = vmatprep.subr.mxu0 %v192
        %285 = vmatpush1.msra.mxu0 %v191
        %286 = vmatprep.subr.mxu0 %v195
        %287 = vmatpush1.msra.mxu0 %v194
        %288 = vmatprep.subr.mxu0 %v198
        %289 = vmatpush1.msra.mxu0 %v197
        %290 = vmatprep.subr.mxu0 %v201
        %291 = vmatpush1.msra.mxu0 %v200
        %292 = vmatprep.subr.mxu0 %v204
        %293 = vmatpush1.msra.mxu0 %v203
        %294 = vmatprep.subr.mxu0 %v207
        %295 = vmatpush1.msra.mxu0 %v206
        %296 = vmatprep.subr.mxu0 %v210
        %297 = vmatpush1.msra.mxu0 %v209
        %298 = vmatprep.subr.mxu0 %v213
        %299 = vmatpush1.msra.mxu0 %v212
        %300 = vmatprep.subr.mxu0 %v216
        %301 = vmatpush1.msra.mxu0 %v215
        %302 = vmatprep.subr.mxu0 %v219
        %303 = vmatpush1.msra.mxu0 %v218
        %304 = vmatprep.subr.mxu0 %v222
        %305 = vmatpush1.msra.mxu0 %v221
        %306 = vmatprep.subr.mxu0 %v225
        %307 = vmatpush1.msra.mxu0 %v224
        %308 = vmatprep.subr.mxu0 %v228
        %309 = vmatpush1.msra.mxu0 %v227
        %310 = vmatprep.subr.mxu0 %v231
        %311 = vmatpush1.msra.mxu0 %v230
        %312 = vmatprep.subr.mxu0 %v234
        %313 = vmatpush1.msra.mxu0 %v233
        %314 = vmatprep.subr.mxu0 %v237
        %315 = vmatpush1.msra.mxu0 %v236
        %316 = vmatprep.subr.mxu0 %v240
        %317 = vmatpush1.msra.mxu0 %v239
        %318 = vmatprep.subr.mxu0 %v243
        %319 = vmatpush1.msra.mxu0 %v242
        %320 = vmatprep.subr.mxu0 %v246
        %321 = vmatpush1.msra.mxu0 %v245
        %322 = vmatprep.subr.mxu0 %v249
        %323 = vmatpush1.msra.mxu0 %v248
        %324 = vmatprep.subr.mxu0 %v252
        %325 = vmatpush1.msra.mxu0 %v251
        %326 = vmatprep.subr.mxu0 %v255
        %327 = vmatpush1.msra.mxu0 %v254
        %328 = vmatprep.subr.mxu0 %v258
        %329 = vmatpush1.msra.mxu0 %v257
        %330 = vmatprep.subr.mxu0 %v261
        %331 = vmatpush1.msra.mxu0 %v260
        %332 = vmatprep.subr.mxu0 %v264
        %333 = vmatpush1.msra.mxu0 %v263
        %334 = vmatprep.subr.mxu0 %v267
        %335 = vmatpush1.msra.mxu0 %v266
        %336 = vmatprep.subr.mxu0 %v270
        %337 = vmatpush1.msra.mxu0 %v269
        %338 = vmatprep.subr.mxu0 %v273
        %339 = vmatpush1.msra.mxu0 %v272
        %340 = vmatprep.subr.mxu0 %v276
        %341 = vmatpush1.msra.mxu0 %v275
        %342 = vmatprep.mubr.f32.mxu0 %v179
        %343 = vmatmul.mubr.f32.gmra.mrb[0].mxu0 %v178
        %v344 = vpop.f32.mrb[0].mxu0
        %v345 = vadd.f32 0.0, %v344
        %v346 = vpop.f32.mrb[0].mxu0
        %v347 = vadd.f32 0.0, %v346
        %348 = vmatprep.mubr.f32.mxu0 %v181
        %349 = vmatmul.mubr.f32.gmra.mrb[0].mxu0 %v180
        %v350 = vpop.f32.mrb[0].mxu0
        %v351 = vadd.f32 0.0, %v350
        %v352 = vpop.f32.mrb[0].mxu0
        %v353 = vadd.f32 0.0, %v352
        %354 = vdwg.mxu0
        %355 = vmatprep.subr.mxu0 0.0
        %356 = vmatpush1.msra.mxu0 %v184
        %357 = vmatprep.subr.mxu0 0.0
        %358 = vmatpush1.msra.mxu0 %v187
        %359 = vmatprep.subr.mxu0 0.0
        %360 = vmatpush1.msra.mxu0 %v190
        %361 = vmatprep.subr.mxu0 0.0
        %362 = vmatpush1.msra.mxu0 %v193
        %363 = vmatprep.subr.mxu0 0.0
        %364 = vmatpush1.msra.mxu0 %v196
        %365 = vmatprep.subr.mxu0 0.0
        %366 = vmatpush1.msra.mxu0 %v199
        %367 = vmatprep.subr.mxu0 0.0
        %368 = vmatpush1.msra.mxu0 %v202
        %369 = vmatprep.subr.mxu0 0.0
        %370 = vmatpush1.msra.mxu0 %v205
        %371 = vmatprep.subr.mxu0 0.0
        %372 = vmatpush1.msra.mxu0 %v208
        %373 = vmatprep.subr.mxu0 0.0
        %374 = vmatpush1.msra.mxu0 %v211
        %375 = vmatprep.subr.mxu0 0.0
        %376 = vmatpush1.msra.mxu0 %v214
        %377 = vmatprep.subr.mxu0 0.0
        %378 = vmatpush1.msra.mxu0 %v217
        %379 = vmatprep.subr.mxu0 0.0
        %380 = vmatpush1.msra.mxu0 %v220
        %381 = vmatprep.subr.mxu0 0.0
        %382 = vmatpush1.msra.mxu0 %v223
        %383 = vmatprep.subr.mxu0 0.0
        %384 = vmatpush1.msra.mxu0 %v226
        %385 = vmatprep.subr.mxu0 0.0
        %386 = vmatpush1.msra.mxu0 %v229
        %387 = vmatprep.subr.mxu0 0.0
        %388 = vmatpush1.msra.mxu0 %v232
        %389 = vmatprep.subr.mxu0 0.0
        %390 = vmatpush1.msra.mxu0 %v235
        %391 = vmatprep.subr.mxu0 0.0
        %392 = vmatpush1.msra.mxu0 %v238
        %393 = vmatprep.subr.mxu0 0.0
        %394 = vmatpush1.msra.mxu0 %v241
        %395 = vmatprep.subr.mxu0 0.0
        %396 = vmatpush1.msra.mxu0 %v244
        %397 = vmatprep.subr.mxu0 0.0
        %398 = vmatpush1.msra.mxu0 %v247
        %399 = vmatprep.subr.mxu0 0.0
        %400 = vmatpush1.msra.mxu0 %v250
        %401 = vmatprep.subr.mxu0 0.0
        %402 = vmatpush1.msra.mxu0 %v253
        %403 = vmatprep.subr.mxu0 0.0
        %404 = vmatpush1.msra.mxu0 %v256
        %405 = vmatprep.subr.mxu0 0.0
        %406 = vmatpush1.msra.mxu0 %v259
        %407 = vmatprep.subr.mxu0 0.0
        %408 = vmatpush1.msra.mxu0 %v262
        %409 = vmatprep.subr.mxu0 0.0
        %410 = vmatpush1.msra.mxu0 %v265
        %411 = vmatprep.subr.mxu0 0.0
        %412 = vmatpush1.msra.mxu0 %v268
        %413 = vmatprep.subr.mxu0 0.0
        %414 = vmatpush1.msra.mxu0 %v271
        %415 = vmatprep.subr.mxu0 0.0
        %416 = vmatpush1.msra.mxu0 %v274
        %417 = vmatprep.subr.mxu0 0.0
        %418 = vmatpush1.msra.mxu0 %v277
        %419 = vmatprep.mubr.f32.mxu0 %v179
        %420 = vmatmul.mubr.f32.gmra.mrb[0].mxu0 %v178
        %v421 = vpop.f32.mrb[0].mxu0
        %v422 = vadd.f32 0.0, %v421
        %v423 = vpop.f32.mrb[0].mxu0
        %424 = vmatprep.mubr.f32.mxu0 %v181
        %425 = vmatmul.mubr.f32.gmra.mrb[0].mxu0 %v180
        %v426 = vpop.f32.mrb[0].mxu0
        %v427 = vadd.f32 0.0, %v426
        %v428 = vpop.f32.mrb[0].mxu0
        %429 = vdwg.mxu0
        %430 = vst [vmem:[%s154] sm:$0xff] %v345
        %431 = vst [vmem:[%s154 + $0x8] sm:$0xff] %v347
        %vm432 = vcmask 7168
        %433 = vst.msk [vmem:[%s154 + $0x10] sm:$0xff] %vm432, %v422
        %434 = vst [vmem:[%s154 + $0x18] sm:$0xff] %v351
        %435 = vst [vmem:[%s154 + $0x20] sm:$0xff] %v353
        %436 = vst.msk [vmem:[%s154 + $0x28] sm:$0xff] %vm432, %v427
        %s437 = sand.u32 %s71, 1
        %s438 = scalar_lea.sflag [#allocation3], %s437
        %s439 = sand.u32 %s71, 1
        %s440 = smul.addr %s439, 48
        %s441 = scalar_lea.vmem [#allocation2], %s440
        // Predicated region
        $region29: #{tpu_custom_call.1} parent=27 // pred_check
          %p442 = pneg %p81
        $region30: #{tpu_custom_call.1} parent=27 // pred_check_branch
          %444 = sbr.rel (%p442) target = $region32
        $region31: #{tpu_custom_call.1} parent=27 // pred_region
          %s445 = smul.u32 2, %s16
          %s446 = ssub.s32 3, %s445
          %p447 = scmp.lt.s32.totalorder %s446, 2
          %s448 = scalar_select %p447, %s446, 2
          %s449 = smul.u32 128, %s448
          %s450 = smul.u32 %s449, 3
          %s452 = ssub.s32 768, %s450
          %453 = vsyncadd %s438, %s452
          %p454 = scmp.ne.s32.totalorder 0, %s450
          %s455 = smul.addr %s445, 3
          %s456 = smul.addr %s455, 128
          %s457 = scalar_lea.hbm %s2, %s456
          %s458 = smul.u32 24, %s448
          %s459 = sshll.u32 %s441, 4
          %s460 = int_to_ptr.vmem [resolvable:$true] %s459
          %s461 = sshll.u32 %s458, 4
          %465 = dma.vmem_to_hbm [thread:$0]  (%p454), %s460, %s461, %s457, %s438, 384, 384, 24
        $region32: #{tpu_custom_call.1} parent=27 // pred_fallthru
          _
      $region28: #{tpu_custom_call.1} parent=5 // pred_fallthru
        _
      %p466 = scmp.le.s32.totalorder 2, %s11
      // Predicated region
      $region33: #{tpu_custom_call.1} parent=5 // pred_check
        %p467 = pneg %p466
      $region34: #{tpu_custom_call.1} parent=5 // pred_check_branch
        %469 = sbr.rel (%p467) target = $region36
      $region35: #{tpu_custom_call.1} parent=5 // pred_region
        %s470 = ssub.s32 %s11, 2
        // Predicated region
        $region37: #{tpu_custom_call.1} parent=35 // pred_check
          %p471 = pneg %p87
        $region38: #{tpu_custom_call.1} parent=35 // pred_check_branch
          %473 = sbr.rel (%p471) target = $region40
        $region39: #{tpu_custom_call.1} parent=35 // pred_region
          %s474 = sand.u32 %s72, 1
          %s475 = scalar_lea.sflag [#allocation3], %s474
          %s476 = sand.u32 %s72, 1
          %s477 = smul.addr %s476, 48
          %s478 = scalar_lea.vmem [#allocation2], %s477
          %479 = dma.done %s475, 768
        $region40: #{tpu_custom_call.1} parent=35 // pred_fallthru
          _
      $region36: #{tpu_custom_call.1} parent=5 // pred_fallthru
        _
    $region6: #{tpu_custom_call.1} parent=1 // loop_footer
      %s15 = sadd.s32 1, %s11
    $region7: #{tpu_custom_call.1} parent=1 // loop_footer_branch
      %10 = sbr.rel target = $region3
    $region8: #{tpu_custom_call.1} parent=1 // loop_exit
      _
    %480 = vsyncpa [#allocation3], 1
    %s481 = scalar_lea.sflag [#allocation3], 1
    %482 = vsyncpa %s481, 1

</llo_original>
